<compile_context>
chip_gen: v7x
topology: tpu7x:2x2x1
jax: 0.10.0
libtpu: 0.0.40
codegen_flags: <defaults>
</compile_context>

<pallas_src>
import functools
import math

import jax
import jax.numpy as jnp
from jax.experimental import pallas as pl
from jax.experimental.pallas import tpu as pltpu


def _round_up(x, m):
    return ((x + m - 1) // m) * m


def _uniform_open_closed(bits_u32):
    """uint32 random bits -> float32 uniform in (0, 1] (24-bit mantissa)."""
    b = bits_u32 & jnp.uint32(0x00FFFFFF)
    return (b.astype(jnp.float32) + 1.0) * jnp.float32(1.0 / 16777216.0)


def encoder_noiser_kernel(emb_ref, w_ref, b_ref, bits_ref,
                          agenda_ref, noisy_ref, acc_ref,
                          *, inv_seq_len, noise_mu, noise_sigma):
    k = pl.program_id(1)

    # --- init the pooled-sum accumulator on the first seq step -------------
    @pl.when(k == 0)
    def _():
        acc_ref[...] = jnp.zeros_like(acc_ref)

    # --- encoder stand-in: accumulate the sequence sum (upcast bf16 -> f32) -
    tile = emb_ref[...].astype(jnp.float32)              # [Bt, St, Hp]
    acc_ref[...] += jnp.sum(tile, axis=1)                # [Bt, Hp]

    # --- finalize: make_agenda matmul + Gaussian noise + stores -------------
    @pl.when(k == pl.num_programs(1) - 1)
    def _():
        pooled = acc_ref[...] * jnp.float32(inv_seq_len)             # mean pool
        agenda = jnp.dot(pooled, w_ref[...],
                         preferred_element_type=jnp.float32) + b_ref[...]
        agenda_ref[...] = agenda

        # Box-Muller from externally drawn uniform bits; the bits are blocked
        # per batch tile, so every tile uses an independent noise stream.
        u1 = _uniform_open_closed(bits_ref[0])                       # [Bt, Ap]
        u2 = _uniform_open_closed(bits_ref[1])                       # [Bt, Ap]
        z = jnp.sqrt(-2.0 * jnp.log(u1)) * jnp.cos(jnp.float32(2.0 * math.pi) * u2)
        noisy_ref[...] = agenda + (jnp.float32(noise_mu) + jnp.float32(noise_sigma) * z)


def encoder_noiser_forward(tokens, embedding, w_agenda, b_agenda, key,
                           *, noise_mu=0.0, noise_sigma=1.0):
    """Returns (agenda, agenda + noise), matching EncoderNoiser.forward."""
    B, S = tokens.shape
    _, H = embedding.shape
    A = w_agenda.shape[1]

    # ---- encoder stand-in, glue part: embedding lookup in bf16 -------------
    # TODO(synk): fuse the gather into the kernel (scalar-prefetch token ids +
    # per-row DMA gather) to avoid materializing emb in HBM at all; kept
    # outside for portability, but in bf16 to halve its HBM traffic.
    emb = jnp.take(embedding.astype(jnp.bfloat16), tokens, axis=0)   # [B, S, H]

    # ---- pad to TPU-friendly shapes (lane-dense feature dims) --------------
    SUB, LANE = 8, 128
    Hp, Ap = _round_up(H, LANE), _round_up(A, LANE)
    Bt = 8
    Bp = _round_up(B, Bt)
    # seq tile sized so each (double-buffered) emb tile stays ~<=4 MiB,
    # comfortably inside every generation's VMEM budget (incl. v7x 64 MiB).
    target_tile_bytes = 4 * 1024 * 1024
    st_cap = max(SUB, (target_tile_bytes // (Bt * Hp * 2)) // SUB * SUB)
    St = min(_round_up(S, SUB), st_cap)
    Sp = _round_up(S, St)

    emb_p = jnp.zeros((Bp, Sp, Hp), jnp.bfloat16).at[:B, :S, :H].set(emb)
    w_p = jnp.zeros((Hp, Ap), jnp.float32).at[:H, :A].set(w_agenda.astype(jnp.float32))
    b_p = jnp.zeros((1, Ap), jnp.float32).at[:, :A].set(b_agenda.astype(jnp.float32))

    # Uniform bits for Box-Muller, drawn once outside (no TPU-only HW PRNG).
    bits = jax.random.bits(key, (2, Bp, Ap), dtype=jnp.uint32)

    grid = (Bp // Bt, Sp // St)

    kernel = functools.partial(
        encoder_noiser_kernel,
        inv_seq_len=1.0 / float(S),
        noise_mu=float(noise_mu),
        noise_sigma=float(noise_sigma),
    )

    cost = pl.CostEstimate(
        flops=Bp * Sp * Hp + 2 * Bp * Hp * Ap,
        transcendentals=3 * Bp * Ap,
        bytes_accessed=emb_p.size * 2 + w_p.size * 4 + b_p.size * 4
                       + bits.size * 4 + 2 * Bp * Ap * 4,
    )

    agenda_p, noisy_p = pl.pallas_call(
        kernel,
        grid=grid,
        in_specs=[
            pl.BlockSpec((Bt, St, Hp), lambda i, k: (i, k, 0)),   # emb tiles (bf16)
            pl.BlockSpec((Hp, Ap), lambda i, k: (0, 0)),          # agenda weight
            pl.BlockSpec((1, Ap), lambda i, k: (0, 0)),           # agenda bias
            pl.BlockSpec((2, Bt, Ap), lambda i, k: (0, i, 0)),    # noise bits
        ],
        out_specs=(
            pl.BlockSpec((Bt, Ap), lambda i, k: (i, 0)),          # agenda
            pl.BlockSpec((Bt, Ap), lambda i, k: (i, 0)),          # agenda + noise
        ),
        out_shape=(jax.ShapeDtypeStruct((Bp, Ap), jnp.float32),
                   jax.ShapeDtypeStruct((Bp, Ap), jnp.float32)),
        scratch_shapes=[pltpu.VMEM((Bt, Hp), jnp.float32)],
        compiler_params=pltpu.CompilerParams(
            dimension_semantics=("parallel", "arbitrary"),
            vmem_limit_bytes=48 * 1024 * 1024,
        ),
        cost_estimate=cost,
    )(emb_p, w_p, b_p, bits)

    return agenda_p[:B, :A], noisy_p[:B, :A]


def kl_penalty(agenda, noise_sigma=1.0):
    """0.5 * sum(agenda^2) * sigma / batch_size  (plain JAX helper, not in forward)."""
    batch_size = agenda.shape[0]
    return 0.5 * jnp.sum(agenda ** 2) * noise_sigma / batch_size


if __name__ == "__main__":
    # TODO(synk): the real `encoder` is injected at construction time; this script
    # uses a deterministic embedding + mean-pool + linear stand-in of matching shape.
    B, S, H, A, VOCAB = 2, 8, 32, 32, 50

    key = jax.random.PRNGKey(0)
    k_tok, k_emb, k_w, k_b, k_noise = jax.random.split(key, 5)

    tokens = jax.random.randint(k_tok, (B, S), 0, VOCAB, dtype=jnp.int32)
    embedding = jax.random.normal(k_emb, (VOCAB, H), dtype=jnp.float32) * 0.1
    w_agenda = jax.random.normal(k_w, (H, A), dtype=jnp.float32) * 0.1
    b_agenda = jax.random.normal(k_b, (1, A), dtype=jnp.float32) * 0.01

    agenda, noisy = encoder_noiser_forward(tokens, embedding, w_agenda, b_agenda, k_noise)
    jax.block_until_ready((agenda, noisy))

    assert agenda.shape == (B, A) and noisy.shape == (B, A)
    assert agenda.dtype == jnp.float32 and noisy.dtype == jnp.float32
    assert bool(jnp.all(jnp.isfinite(agenda))) and bool(jnp.all(jnp.isfinite(noisy)))
    # the returned pair must differ exactly by the generated noise
    assert not bool(jnp.allclose(noisy, agenda))

    # reference check for the deterministic (agenda) path
    emb_ref = jnp.take(embedding, tokens, axis=0)
    agenda_ref = emb_ref.mean(axis=1) @ w_agenda + b_agenda
    assert bool(jnp.allclose(agenda, agenda_ref, atol=1e-2, rtol=1e-2))

    _ = kl_penalty(agenda)  # exercised for completeness

    print("KERNEL_OK")
</pallas_src>

<mosaic_0001>
module attributes {stable_mosaic.version = 11 : i64} {
  func.func @encoder_noiser_kernel(%arg0: i32, %arg1: i32, %arg2: memref<8x8x128xbf16, #tpu.memory_space<vmem>>, %arg3: memref<128x128xf32, #tpu.memory_space<vmem>>, %arg4: memref<1x128xf32, #tpu.memory_space<vmem>>, %arg5: memref<2x8x128xi32, #tpu.memory_space<vmem>>, %arg6: memref<8x128xf32, #tpu.memory_space<vmem>>, %arg7: memref<8x128xf32, #tpu.memory_space<vmem>>, %arg8: memref<8x128xf32, #tpu.memory_space<vmem>>) attributes {dimension_semantics = [#tpu.dimension_semantics<parallel>, #tpu.dimension_semantics<arbitrary>], iteration_bounds = array<i64: 1, 1>, scalar_prefetch = 0 : i64, scratch_operands = 1 : i64, tpu.core_type = #tpu.core_type<tc>, window_params = [{transform_indices = @transform_0, window_bounds = array<i64: 8, 8, 128>}, {pipeline_mode = #tpu.pipeline_mode<synchronous>, transform_indices = @transform_1, window_bounds = array<i64: 128, 128>}, {pipeline_mode = #tpu.pipeline_mode<synchronous>, transform_indices = @transform_2, window_bounds = array<i64: 1, 128>}, {transform_indices = @transform_3, window_bounds = array<i64: 2, 8, 128>}, {transform_indices = @transform_4, window_bounds = array<i64: 8, 128>}, {transform_indices = @transform_5, window_bounds = array<i64: 8, 128>}]} {
    %c0_i32 = arith.constant 0 : i32
    %0 = arith.cmpi eq, %arg1, %c0_i32 : i32
    %1 = arith.extui %0 : i1 to i32
    %c0_i32_0 = arith.constant 0 : i32
    %2 = arith.cmpi ne, %1, %c0_i32_0 : i32
    scf.if %2 {
      %cst_9 = arith.constant 0.000000e+00 : f32
      %12 = vector.broadcast %cst_9 : f32 to vector<8x128xf32>
      %c0_10 = arith.constant 0 : index
      %c0_11 = arith.constant 0 : index
      %13 = vector.load %arg8[%c0_10, %c0_11] : memref<8x128xf32, #tpu.memory_space<vmem>>, vector<8x128xf32>
      tpu.vector_store %arg8[%c0_10, %c0_11], %12 {strides = array<i32>} : memref<8x128xf32, #tpu.memory_space<vmem>>, vector<8x128xf32>,
    } else {
    }
    %c0 = arith.constant 0 : index
    %c0_1 = arith.constant 0 : index
    %c0_2 = arith.constant 0 : index
    %3 = vector.load %arg2[%c0, %c0_1, %c0_2] : memref<8x8x128xbf16, #tpu.memory_space<vmem>>, vector<8x8x128xbf16>
    %4 = arith.extf %3 : vector<8x8x128xbf16> to vector<8x8x128xf32>
    %c0_3 = arith.constant 0 : index
    %c0_4 = arith.constant 0 : index
    %5 = vector.load %arg8[%c0_3, %c0_4] : memref<8x128xf32, #tpu.memory_space<vmem>>, vector<8x128xf32>
    %cst = arith.constant dense<0.000000e+00> : vector<8x128xf32>
    %6 = vector.multi_reduction <add>, %4, %cst [1] : vector<8x8x128xf32> to vector<8x128xf32>
    %7 = arith.addf %5, %6 : vector<8x128xf32>
    %c0_5 = arith.constant 0 : index
    %c0_6 = arith.constant 0 : index
    %8 = vector.load %arg8[%c0_5, %c0_6] : memref<8x128xf32, #tpu.memory_space<vmem>>, vector<8x128xf32>
    tpu.vector_store %arg8[%c0_5, %c0_6], %7 {strides = array<i32>} : memref<8x128xf32, #tpu.memory_space<vmem>>, vector<8x128xf32>,
    %c0_i32_7 = arith.constant 0 : i32
    %9 = arith.cmpi eq, %arg1, %c0_i32_7 : i32
    %10 = arith.extui %9 : i1 to i32
    %c0_i32_8 = arith.constant 0 : i32
    %11 = arith.cmpi ne, %10, %c0_i32_8 : i32
    scf.if %11 {
      %c0_9 = arith.constant 0 : index
      %c0_10 = arith.constant 0 : index
      %12 = vector.load %arg8[%c0_9, %c0_10] : memref<8x128xf32, #tpu.memory_space<vmem>>, vector<8x128xf32>
      %cst_11 = arith.constant 1.250000e-01 : f32
      %13 = vector.broadcast %cst_11 : f32 to vector<8x128xf32>
      %14 = arith.mulf %12, %13 : vector<8x128xf32>
      %c0_12 = arith.constant 0 : index
      %c0_13 = arith.constant 0 : index
      %15 = vector.load %arg3[%c0_12, %c0_13] : memref<128x128xf32, #tpu.memory_space<vmem>>, vector<128x128xf32>
      %cst_14 = arith.constant dense<0.000000e+00> : vector<8x128xf32>
      %16 = tpu.matmul %14, %15, %cst_14 {dimension_numbers = #tpu.dot_dimension_numbers<[1], [0], [0], [1], [0, 0, 1, 1], [], []>} : vector<8x128xf32>, vector<128x128xf32>, vector<8x128xf32> -> vector<8x128xf32>
      %c0_15 = arith.constant 0 : index
      %c0_16 = arith.constant 0 : index
      %17 = vector.load %arg4[%c0_15, %c0_16] : memref<1x128xf32, #tpu.memory_space<vmem>>, vector<1x128xf32>
      %18 = vector.broadcast %17 : vector<1x128xf32> to vector<8x128xf32>
      %19 = arith.addf %16, %18 : vector<8x128xf32>
      %c0_17 = arith.constant 0 : index
      %c0_18 = arith.constant 0 : index
      %20 = vector.load %arg6[%c0_17, %c0_18] : memref<8x128xf32, #tpu.memory_space<vmem>>, vector<8x128xf32>
      tpu.vector_store %arg6[%c0_17, %c0_18], %19 {strides = array<i32>} : memref<8x128xf32, #tpu.memory_space<vmem>>, vector<8x128xf32>,
      %c0_19 = arith.constant 0 : index
      %c0_20 = arith.constant 0 : index
      %c0_21 = arith.constant 0 : index
      %21 = vector.load %arg5[%c0_19, %c0_20, %c0_21] : memref<2x8x128xi32, #tpu.memory_space<vmem>>, vector<1x8x128xi32>
      %22 = vector.shape_cast %21 : vector<1x8x128xi32> to vector<8x128xi32>
      %c16777215_i32 = arith.constant 16777215 : i32
      %23 = vector.broadcast %c16777215_i32 : i32 to vector<8x128xi32>
      %24 = arith.andi %22, %23 : vector<8x128xi32>
      %25 = arith.uitofp %24 : vector<8x128xi32> to vector<8x128xf32>
      %cst_22 = arith.constant 1.000000e+00 : f32
      %26 = vector.broadcast %cst_22 : f32 to vector<8x128xf32>
      %27 = arith.addf %25, %26 : vector<8x128xf32>
      %cst_23 = arith.constant 5.96046448E-8 : f32
      %28 = vector.broadcast %cst_23 : f32 to vector<8x128xf32>
      %29 = arith.mulf %27, %28 : vector<8x128xf32>
      %c1 = arith.constant 1 : index
      %c0_24 = arith.constant 0 : index
      %c0_25 = arith.constant 0 : index
      %30 = vector.load %arg5[%c1, %c0_24, %c0_25] : memref<2x8x128xi32, #tpu.memory_space<vmem>>, vector<1x8x128xi32>
      %31 = vector.shape_cast %30 : vector<1x8x128xi32> to vector<8x128xi32>
      %c16777215_i32_26 = arith.constant 16777215 : i32
      %32 = vector.broadcast %c16777215_i32_26 : i32 to vector<8x128xi32>
      %33 = arith.andi %31, %32 : vector<8x128xi32>
      %34 = arith.uitofp %33 : vector<8x128xi32> to vector<8x128xf32>
      %cst_27 = arith.constant 1.000000e+00 : f32
      %35 = vector.broadcast %cst_27 : f32 to vector<8x128xf32>
      %36 = arith.addf %34, %35 : vector<8x128xf32>
      %cst_28 = arith.constant 5.96046448E-8 : f32
      %37 = vector.broadcast %cst_28 : f32 to vector<8x128xf32>
      %38 = arith.mulf %36, %37 : vector<8x128xf32>
      %39 = math.log %29 : vector<8x128xf32>
      %cst_29 = arith.constant -2.000000e+00 : f32
      %40 = vector.broadcast %cst_29 : f32 to vector<8x128xf32>
      %41 = arith.mulf %40, %39 : vector<8x128xf32>
      %42 = math.sqrt %41 : vector<8x128xf32>
      %cst_30 = arith.constant 6.28318548 : f32
      %43 = vector.broadcast %cst_30 : f32 to vector<8x128xf32>
      %44 = arith.mulf %43, %38 : vector<8x128xf32>
      %45 = math.cos %44 : vector<8x128xf32>
      %46 = arith.mulf %42, %45 : vector<8x128xf32>
      %cst_31 = arith.constant 1.000000e+00 : f32
      %47 = vector.broadcast %cst_31 : f32 to vector<8x128xf32>
      %48 = arith.mulf %47, %46 : vector<8x128xf32>
      %cst_32 = arith.constant 0.000000e+00 : f32
      %49 = vector.broadcast %cst_32 : f32 to vector<8x128xf32>
      %50 = arith.addf %49, %48 : vector<8x128xf32>
      %51 = arith.addf %19, %50 : vector<8x128xf32>
      %c0_33 = arith.constant 0 : index
      %c0_34 = arith.constant 0 : index
      %52 = vector.load %arg7[%c0_33, %c0_34] : memref<8x128xf32, #tpu.memory_space<vmem>>, vector<8x128xf32>
      tpu.vector_store %arg7[%c0_33, %c0_34], %51 {strides = array<i32>} : memref<8x128xf32, #tpu.memory_space<vmem>>, vector<8x128xf32>,
    } else {
    }
    return
  }
  func.func @transform_0(%arg0: i32, %arg1: i32) -> (i32, i32, i32) {
    %c0_i32 = arith.constant 0 : i32
    %c0_i32_0 = arith.constant 0 : i32
    return %arg0, %arg1, %c0_i32 : i32, i32, i32
  }
  func.func @transform_1(%arg0: i32, %arg1: i32) -> (i32, i32) {
    %c0_i32 = arith.constant 0 : i32
    %c0_i32_0 = arith.constant 0 : i32
    %c0_i32_1 = arith.constant 0 : i32
    return %c0_i32, %c0_i32_0 : i32, i32
  }
  func.func @transform_2(%arg0: i32, %arg1: i32) -> (i32, i32) {
    %c0_i32 = arith.constant 0 : i32
    %c0_i32_0 = arith.constant 0 : i32
    %c0_i32_1 = arith.constant 0 : i32
    return %c0_i32, %c0_i32_0 : i32, i32
  }
  func.func @transform_3(%arg0: i32, %arg1: i32) -> (i32, i32, i32) {
    %c0_i32 = arith.constant 0 : i32
    %c0_i32_0 = arith.constant 0 : i32
    %c0_i32_1 = arith.constant 0 : i32
    return %c0_i32, %arg0, %c0_i32_0 : i32, i32, i32
  }
  func.func @transform_4(%arg0: i32, %arg1: i32) -> (i32, i32) {
    %c0_i32 = arith.constant 0 : i32
    %c0_i32_0 = arith.constant 0 : i32
    return %arg0, %c0_i32 : i32, i32
  }
  func.func @transform_5(%arg0: i32, %arg1: i32) -> (i32, i32) {
    %c0_i32 = arith.constant 0 : i32
    %c0_i32_0 = arith.constant 0 : i32
    return %arg0, %c0_i32 : i32, i32
  }
}

</mosaic_0001>

<llo_original>
// kernel: tpu_custom_call.1
$region0: #{tpu_custom_call.1}
  #allocation0 [shape = 'u32[]', space=smem, size = 0x4, offset = 0x4, fixed_abs, tag = 'smem constant byte address 0x4 - core index']
  #allocation1 [shape = 'u32[144,128]{1,0:T(1,128)}', space=vmem, size = 0x12000, scoped, tag = 'internal scratch']
  #allocation2 [shape = 'f32[8,128]{1,0:T(8,128)}', space=vmem, size = 0x1000, scoped, tag = 'scratch operand']
  %s0 = inlined_call_operand.hbm [shape: bf16[8,8,128], index: 0, kind: input, shape index: {}]
  %s1 = inlined_call_operand.hbm [shape: f32[128,128], index: 1, kind: input, shape index: {}]
  %s2 = inlined_call_operand.vmem [shape: f32[1,128], index: 2, kind: input, shape index: {}]
  %s3 = inlined_call_operand.hbm [shape: u32[2,8,128], index: 3, kind: input, shape index: {}]
  %s4 = inlined_call_operand.hbm [shape: f32[8,128], index: 4, kind: output, shape index: {0}]
  %s5 = inlined_call_operand.hbm [shape: f32[8,128], index: 5, kind: output, shape index: {1}]
  %6 = xla_tuple %s4, %s5
  %s7 = sld [smem:[#allocation0]]
  $region54: #{tpu_custom_call.1} parent=0
    _
  %s9 = ssub.s32 1, %s7
  %s10 = scalar_select 0, %s9, %s7
  $region1: #{tpu_custom_call.1} parent=0
    #allocation3 [shape = 'u8[16384]{0}', space=vmem, size = 0x4000, scoped, tag = 'input window, operand 0, single buffered']
    #allocation4 [shape = 's32[1]{0}', space=sflag, size = 0x4, scoped, tag = 'scoped memory for tpu_custom_call.1']
    #allocation5 [shape = 's32[1]{0}', space=sflag, size = 0x4, scoped, tag = 'scoped memory for tpu_custom_call.1']
    #allocation6 [shape = 'u8[65536]{0}', space=vmem, size = 0x10000, scoped, tag = 'input window, operand 1, single buffered']
    #allocation7 [shape = 's32[1]{0}', space=sflag, size = 0x4, scoped, tag = 'scoped memory for tpu_custom_call.1']
    #allocation8 [shape = 'u8[8192]{0}', space=vmem, size = 0x2000, scoped, tag = 'input window, operand 3, single buffered']
    #allocation9 [shape = 'u8[4096]{0}', space=vmem, size = 0x1000, scoped, tag = 'output window, operand 0, single buffered']
    #allocation10 [shape = 'u8[4096]{0}', space=vmem, size = 0x1000, scoped, tag = 'output window, operand 1, single buffered']
    #allocation11 [shape = 's32[1]{0}', space=sflag, size = 0x4, scoped, tag = 'scoped memory for tpu_custom_call.1']
    %11 = vsyncpa [#allocation4], 0
    %12 = vsyncpa [#allocation7], 0
    %13 = vsyncpa [#allocation5], 0
    %14 = vsyncpa [#allocation11], 0
    // Predicated region
    $region2: #{tpu_custom_call.1} parent=1 // pred_check
      _
    $region3: #{tpu_custom_call.1} parent=1 // pred_check_branch
      %16 = sbr.rel (0) target = $region5
    $region4: #{tpu_custom_call.1} parent=1 // pred_region
      %s18 = ssub.s32 512, 512
      %19 = vsyncadd [#allocation4], %s18
      %s20 = sshll.u32 [#allocation3], 4
      %s21 = int_to_ptr.vmem [resolvable:$true] %s20
      %26 = dma.hbm_to_vmem [thread:$0]  %s0, 512, %s21, [#allocation4], 64, 64, 4
    $region5: #{tpu_custom_call.1} parent=1 // pred_fallthru
      _
    // Predicated region
    $region6: #{tpu_custom_call.1} parent=1 // pred_check
      _
    $region7: #{tpu_custom_call.1} parent=1 // pred_check_branch
      %28 = sbr.rel (0) target = $region9
    $region8: #{tpu_custom_call.1} parent=1 // pred_region
      %s30 = ssub.s32 2048, 2048
      %31 = vsyncadd [#allocation7], %s30
      %s32 = sshll.u32 [#allocation6], 4
      %s33 = int_to_ptr.vmem [resolvable:$true] %s32
      %38 = dma.hbm_to_vmem [thread:$0]  %s1, 2048, %s33, [#allocation7], 128, 128, 8
    $region9: #{tpu_custom_call.1} parent=1 // pred_fallthru
      _
    // Predicated region
    $region10: #{tpu_custom_call.1} parent=1 // pred_check
      _
    $region11: #{tpu_custom_call.1} parent=1 // pred_check_branch
      %40 = sbr.rel (0) target = $region13
    $region12: #{tpu_custom_call.1} parent=1 // pred_region
      _
    $region13: #{tpu_custom_call.1} parent=1 // pred_fallthru
      _
    // Predicated region
    $region14: #{tpu_custom_call.1} parent=1 // pred_check
      _
    $region15: #{tpu_custom_call.1} parent=1 // pred_check_branch
      %42 = sbr.rel (0) target = $region17
    $region16: #{tpu_custom_call.1} parent=1 // pred_region
      %s44 = ssub.s32 256, 256
      %45 = vsyncadd [#allocation7], %s44
      %s46 = sshll.u32 [#allocation8], 4
      %s47 = int_to_ptr.vmem [resolvable:$true] %s46
      %52 = dma.hbm_to_vmem [thread:$0]  %s3, 256, %s47, [#allocation7], 128, 128, 8
    $region17: #{tpu_custom_call.1} parent=1 // pred_fallthru
      _
    // Predicated region
    $region18: #{tpu_custom_call.1} parent=1 // pred_check
      _
    $region19: #{tpu_custom_call.1} parent=1 // pred_check_branch
      %54 = sbr.rel (0) target = $region21
    $region20: #{tpu_custom_call.1} parent=1 // pred_region
      %55 = dma.done [#allocation4], 512
    $region21: #{tpu_custom_call.1} parent=1 // pred_fallthru
      _
    // Predicated region
    $region22: #{tpu_custom_call.1} parent=1 // pred_check
      _
    $region23: #{tpu_custom_call.1} parent=1 // pred_check_branch
      %57 = sbr.rel (0) target = $region25
    $region24: #{tpu_custom_call.1} parent=1 // pred_region
      %58 = dma.done [#allocation7], 2048
    $region25: #{tpu_custom_call.1} parent=1 // pred_fallthru
      _
    // Predicated region
    $region26: #{tpu_custom_call.1} parent=1 // pred_check
      _
    $region27: #{tpu_custom_call.1} parent=1 // pred_check_branch
      %60 = sbr.rel (0) target = $region29
    $region28: #{tpu_custom_call.1} parent=1 // pred_region
      %61 = dma.done [#allocation7], 256
    $region29: #{tpu_custom_call.1} parent=1 // pred_fallthru
      _
    %p62 = scmp.eq.s32.totalorder 0, 0
    // Predicated region
    $region30: #{tpu_custom_call.1} parent=1 // pred_check
      %p63 = pneg %p62
    $region31: #{tpu_custom_call.1} parent=1 // pred_check_branch
      %65 = sbr.rel (%p63) target = $region33
    $region32: #{tpu_custom_call.1} parent=1 // pred_region
      %66 = vst [vmem:[#allocation2] sm:$0xff] 0.0
    $region33: #{tpu_custom_call.1} parent=1 // pred_fallthru
      _
    %v67 = vld [vmem:[#allocation3] sm:$0xf]
    %v68 = vld [vmem:[#allocation3 + $0x4] sm:$0xf]
    %v69 = vld [vmem:[#allocation3 + $0x8] sm:$0xf]
    %v70 = vld [vmem:[#allocation3 + $0xc] sm:$0xf]
    %v71 = vld [vmem:[#allocation3 + $0x10] sm:$0xf]
    %v72 = vld [vmem:[#allocation3 + $0x14] sm:$0xf]
    %v73 = vld [vmem:[#allocation3 + $0x18] sm:$0xf]
    %v74 = vld [vmem:[#allocation3 + $0x1c] sm:$0xf]
    %v75 = vunpack.c.l.bf16 %v67
    %v76 = vunpack.c.l.bf16 %v68
    %v77 = vunpack.c.l.bf16 %v69
    %v78 = vunpack.c.l.bf16 %v70
    %v79 = vunpack.c.l.bf16 %v71
    %v80 = vunpack.c.l.bf16 %v72
    %v81 = vunpack.c.l.bf16 %v73
    %v82 = vunpack.c.l.bf16 %v74
    %v83 = vld [vmem:[#allocation2] sm:$0xff]
    %v84 = vrot.slane %v75, 4
    %v85 = vadd.f32 %v75, %v84
    %v86 = vrot.slane %v85, 2
    %v87 = vadd.f32 %v85, %v86
    %v88 = vrot.slane %v87, 1
    %v89 = vadd.f32 %v87, %v88
    %v90 = vrot.slane %v76, 4
    %v91 = vadd.f32 %v76, %v90
    %v92 = vrot.slane %v91, 2
    %v93 = vadd.f32 %v91, %v92
    %v94 = vrot.slane %v93, 1
    %v95 = vadd.f32 %v93, %v94
    %v96 = vrot.slane %v77, 4
    %v97 = vadd.f32 %v77, %v96
    %v98 = vrot.slane %v97, 2
    %v99 = vadd.f32 %v97, %v98
    %v100 = vrot.slane %v99, 1
    %v101 = vadd.f32 %v99, %v100
    %v102 = vrot.slane %v78, 4
    %v103 = vadd.f32 %v78, %v102
    %v104 = vrot.slane %v103, 2
    %v105 = vadd.f32 %v103, %v104
    %v106 = vrot.slane %v105, 1
    %v107 = vadd.f32 %v105, %v106
    %v108 = vrot.slane %v79, 4
    %v109 = vadd.f32 %v79, %v108
    %v110 = vrot.slane %v109, 2
    %v111 = vadd.f32 %v109, %v110
    %v112 = vrot.slane %v111, 1
    %v113 = vadd.f32 %v111, %v112
    %v114 = vrot.slane %v80, 4
    %v115 = vadd.f32 %v80, %v114
    %v116 = vrot.slane %v115, 2
    %v117 = vadd.f32 %v115, %v116
    %v118 = vrot.slane %v117, 1
    %v119 = vadd.f32 %v117, %v118
    %v120 = vrot.slane %v81, 4
    %v121 = vadd.f32 %v81, %v120
    %v122 = vrot.slane %v121, 2
    %v123 = vadd.f32 %v121, %v122
    %v124 = vrot.slane %v123, 1
    %v125 = vadd.f32 %v123, %v124
    %v126 = vrot.slane %v82, 4
    %v127 = vadd.f32 %v82, %v126
    %v128 = vrot.slane %v127, 2
    %v129 = vadd.f32 %v127, %v128
    %v130 = vrot.slane %v129, 1
    %v131 = vadd.f32 %v129, %v130
    %vm140 = vcmask 1041409
    %v141 = vsel %vm140, %v95, %v89
    %vm142 = vcmask 1042434
    %v143 = vsel %vm142, %v101, %v141
    %vm144 = vcmask 1043459
    %v145 = vsel %vm144, %v107, %v143
    %vm146 = vcmask 1044484
    %v147 = vsel %vm146, %v113, %v145
    %vm148 = vcmask 1045509
    %v149 = vsel %vm148, %v119, %v147
    %vm150 = vcmask 1046534
    %v151 = vsel %vm150, %v125, %v149
    %vm152 = vcmask 1047559
    %v153 = vsel %vm152, %v131, %v151
    %v155 = vadd.f32 %v83, %v153
    %156 = vst [vmem:[#allocation2] sm:$0xff] %v155
    // Predicated region
    $region34: #{tpu_custom_call.1} parent=1 // pred_check
      %p157 = pneg %p62
    $region35: #{tpu_custom_call.1} parent=1 // pred_check_branch
      %159 = sbr.rel (%p157) target = $region37
    $region36: #{tpu_custom_call.1} parent=1 // pred_region
      %v160 = vld [vmem:[#allocation2] sm:$0xff]
      %v161 = vmul.f32 %v160, 0.125
      %v162 = vld [vmem:[#allocation6] sm:$0xff]
      %v163 = vld [vmem:[#allocation6 + $0x8] sm:$0xff]
      %v164 = vld [vmem:[#allocation6 + $0x10] sm:$0xff]
      %v165 = vld [vmem:[#allocation6 + $0x18] sm:$0xff]
      %v166 = vld [vmem:[#allocation6 + $0x20] sm:$0xff]
      %v167 = vld [vmem:[#allocation6 + $0x28] sm:$0xff]
      %v168 = vld [vmem:[#allocation6 + $0x30] sm:$0xff]
      %v169 = vld [vmem:[#allocation6 + $0x38] sm:$0xff]
      %v170 = vld [vmem:[#allocation6 + $0x40] sm:$0xff]
      %v171 = vld [vmem:[#allocation6 + $0x48] sm:$0xff]
      %v172 = vld [vmem:[#allocation6 + $0x50] sm:$0xff]
      %v173 = vld [vmem:[#allocation6 + $0x58] sm:$0xff]
      %v174 = vld [vmem:[#allocation6 + $0x60] sm:$0xff]
      %v175 = vld [vmem:[#allocation6 + $0x68] sm:$0xff]
      %v176 = vld [vmem:[#allocation6 + $0x70] sm:$0xff]
      %v177 = vld [vmem:[#allocation6 + $0x78] sm:$0xff]
      %v178 = vld [vmem:[%s2] sm:$0x1]
      %v180 = vlaneseq
      %v181 = vshrl.u32 %v180, 7
      %v182 = vsub.s32 0, %v181
      %v183 = vrot.slane %v178, %v182
      %185 = vmatprep.subr.mxu0 0.0
      %186 = vmatpush1.msra.mxu0 %v162
      %187 = vmatprep.subr.mxu0 0.0
      %188 = vmatpush1.msra.mxu0 %v163
      %189 = vmatprep.subr.mxu0 0.0
      %190 = vmatpush1.msra.mxu0 %v164
      %191 = vmatprep.subr.mxu0 0.0
      %192 = vmatpush1.msra.mxu0 %v165
      %193 = vmatprep.subr.mxu0 0.0
      %194 = vmatpush1.msra.mxu0 %v166
      %195 = vmatprep.subr.mxu0 0.0
      %196 = vmatpush1.msra.mxu0 %v167
      %197 = vmatprep.subr.mxu0 0.0
      %198 = vmatpush1.msra.mxu0 %v168
      %199 = vmatprep.subr.mxu0 0.0
      %200 = vmatpush1.msra.mxu0 %v169
      %201 = vmatprep.subr.mxu0 0.0
      %202 = vmatpush1.msra.mxu0 %v170
      %203 = vmatprep.subr.mxu0 0.0
      %204 = vmatpush1.msra.mxu0 %v171
      %205 = vmatprep.subr.mxu0 0.0
      %206 = vmatpush1.msra.mxu0 %v172
      %207 = vmatprep.subr.mxu0 0.0
      %208 = vmatpush1.msra.mxu0 %v173
      %209 = vmatprep.subr.mxu0 0.0
      %210 = vmatpush1.msra.mxu0 %v174
      %211 = vmatprep.subr.mxu0 0.0
      %212 = vmatpush1.msra.mxu0 %v175
      %213 = vmatprep.subr.mxu0 0.0
      %214 = vmatpush1.msra.mxu0 %v176
      %215 = vmatprep.subr.mxu0 0.0
      %216 = vmatpush1.msra.mxu0 %v177
      %217 = vmatprep.subr.mxu0 0.0
      %218 = vmatpush1.msra.mxu0 0.0
      %219 = vmatprep.subr.mxu0 0.0
      %220 = vmatpush1.msra.mxu0 0.0
      %221 = vmatprep.subr.mxu0 0.0
      %222 = vmatpush1.msra.mxu0 0.0
      %223 = vmatprep.subr.mxu0 0.0
      %224 = vmatpush1.msra.mxu0 0.0
      %225 = vmatprep.subr.mxu0 0.0
      %226 = vmatpush1.msra.mxu0 0.0
      %227 = vmatprep.subr.mxu0 0.0
      %228 = vmatpush1.msra.mxu0 0.0
      %229 = vmatprep.subr.mxu0 0.0
      %230 = vmatpush1.msra.mxu0 0.0
      %231 = vmatprep.subr.mxu0 0.0
      %232 = vmatpush1.msra.mxu0 0.0
      %233 = vmatprep.subr.mxu0 0.0
      %234 = vmatpush1.msra.mxu0 0.0
      %235 = vmatprep.subr.mxu0 0.0
      %236 = vmatpush1.msra.mxu0 0.0
      %237 = vmatprep.subr.mxu0 0.0
      %238 = vmatpush1.msra.mxu0 0.0
      %239 = vmatprep.subr.mxu0 0.0
      %240 = vmatpush1.msra.mxu0 0.0
      %241 = vmatprep.subr.mxu0 0.0
      %242 = vmatpush1.msra.mxu0 0.0
      %243 = vmatprep.subr.mxu0 0.0
      %244 = vmatpush1.msra.mxu0 0.0
      %245 = vmatprep.subr.mxu0 0.0
      %246 = vmatpush1.msra.mxu0 0.0
      %247 = vmatprep.subr.mxu0 0.0
      %248 = vmatpush1.msra.mxu0 0.0
      %249 = vmatprep.mubr.f32.mxu0 0.0
      %250 = vmatmul.mubr.f32.gmra.mrb[0].mxu0 %v161
      %v251 = vpop.f32.mrb[0].mxu0
      %v252 = vadd.f32 %v183, %v251
      %v253 = vpop.f32.mrb[0].mxu0
      %254 = vdwg.mxu0
      %255 = vst [vmem:[#allocation9] sm:$0xff] %v252
      %v256 = vld [vmem:[#allocation8] sm:$0xff]
      %v257 = vand.u32 %v256, 16777215
      %v258 = vshrl.u32 %v257, 16
      %v259 = vand.u32 %v257, 65535
      %v260 = vcvt.s32.f32 %v258
      %v261 = vmul.f32 %v260, 65536.0
      %v262 = vcvt.s32.f32 %v259
      %v263 = vadd.f32 %v261, %v262
      %v264 = vadd.f32 %v263, 1.0
      %v265 = vmul.f32 %v264, 5.9604645e-08
      %s266 = scalar_lea.vmem [#allocation8], 8
      %v267 = vld [vmem:[%s266] sm:$0xff]
      %v268 = vand.u32 %v267, 16777215
      %v269 = vshrl.u32 %v268, 16
      %v270 = vand.u32 %v268, 65535
      %v271 = vcvt.s32.f32 %v269
      %v272 = vmul.f32 %v271, 65536.0
      %v273 = vcvt.s32.f32 %v270
      %v274 = vadd.f32 %v272, %v273
      %v275 = vadd.f32 %v274, 1.0
      %v276 = vmul.f32 %v275, 5.9604645e-08
      %v277 = vlog2.pop %v265
      %v278 = vmul.f32 %v277, 0.6931472
      %v279 = vmul.f32 %v278, -2.0
      %v280 = vrsqrt.pop %v279
      %v281 = vmul.f32 %v279, %v280
      %vm282 = vcmp.eq.f32.partialorder %v279, inf
      %v283 = vsel %vm282, %v279, %v281
      %vm284 = vcmp.eq.f32.partialorder %v279, 0.0
      %v285 = vand.u32 %v279, 2147483648
      %v286 = vsel %vm284, %v285, %v283
      %v287 = vmul.f32 %v276, 6.2831855
      %v288 = vand.u32 2147483647, %v287
      %vm289 = vcmp.le.f32.partialorder %v288, 0.7853982
      %vm290 = vcmp.lt.s32.totalorder %v287, 0
      %v291 = vand.u32 %v287, 2139095040
      %v292 = vshrl.u32 %v291, 23
      %v293 = vsub.s32 %v292, 127
      %v294 = vand.u32 2147483647, %v287
      %v295 = vand.u32 %v294, 8388607
      %v296 = vor.u32 %v295, 8388608
      %v297 = vsub.s32 0, %v296
      %v298 = vadd.s32 %v293, 1
      %vm299 = vcmp.gt.s32.totalorder %v298, 0
      %v300 = vsel %vm299, %v298, 0
      %v301 = vshrl.u32 %v300, 5
      %v302 = vand.u32 %v300, 31
      %v303 = vsub.s32 32, %v302
      %v304 = vshrl.u32 683565275, %v303
      %v305 = vshll.u32 683565275, %v302
      %v306 = vshrl.u32 2475754826, %v303
      %v307 = vor.u32 %v305, %v306
      %v308 = vshll.u32 2475754826, %v302
      %v309 = vshrl.u32 2131351028, %v303
      %v310 = vor.u32 %v308, %v309
      %v311 = vshll.u32 2131351028, %v302
      %v312 = vshrl.u32 2102212464, %v303
      %v313 = vor.u32 %v311, %v312
      %v314 = vshll.u32 2102212464, %v302
      %v315 = vshrl.u32 920167782, %v303
      %v316 = vor.u32 %v314, %v315
      %v317 = vshll.u32 920167782, %v302
      %v318 = vshrl.u32 1326507024, %v303
      %v319 = vor.u32 %v317, %v318
      %vm320 = vcmp.lt.s32.totalorder %v301, 1
      %vm321 = vcmp.lt.s32.totalorder %v301, 2
      %vm322 = vcmp.lt.s32.totalorder %v301, 3
      %vm323 = vcmp.lt.s32.totalorder %v301, 4
      %v324 = vsel %vm320, %v304, %v307
      %v325 = vsel %vm323, %v313, 2102212464
      %v326 = vsel %vm322, %v310, %v325
      %v327 = vsel %vm321, %v324, %v326
      %v328 = vsel %vm320, %v307, %v310
      %v329 = vsel %vm323, %v316, 920167782
      %v330 = vsel %vm322, %v313, %v329
      %v331 = vsel %vm321, %v328, %v330
      %v332 = vsel %vm320, %v310, %v313
      %v333 = vsel %vm323, %v319, 1326507024
      %v334 = vsel %vm322, %v316, %v333
      %v335 = vsel %vm321, %v332, %v334
      %v336 = vshll.u32 %v296, 8
      %v337 = vmul.u32.u64.compose %v336, %v335
      %v338 = vextract.low.u32 %v337
      %v339 = vextract.high.u32 %v337
      %v340 = vmul.u32.u64.compose %v336, %v331
      %v341 = vextract.low.u32 %v340
      %v342 = vextract.high.u32 %v340
      %v343 = vmul.u32 %v336, %v327
      %v344 = vadd.s32 %v339, %v341
      %vm345 = vc.u32 %v339, %v341
      %v346 = vadd.s32 %v342, 1
      %v347 = vsel %vm345, %v346, %v342
      %v348 = vadd.s32 %v343, %v347
      %v349 = vadd.s32 %v348, 536870912
      %v350 = vshrl.u32 %v349, 30
      %v351 = vshll.u32 %v350, 30
      %v352 = vsub.s32 %v348, %v351
      %vm353 = vcmp.lt.s32.totalorder %v352, 0
      %v354 = vsub.s32 0, %v352
      %v355 = vsel %vm353, %v354, %v352
      %v356 = vclz %v355
      %v357 = vsub.s32 %v356, 2
      %vm358 = vcmp.gt.s32.totalorder 0, %v357
      %v359 = vsel %vm358, 0, %v357
      %v360 = vsub.s32 32, %v359
      %v361 = vshll.u32 %v352, %v359
      %v362 = vshrl.u32 %v344, %v360
      %v363 = vor.u32 %v361, %v362
      %v364 = vsub.s32 4294967266, %v359
      %v365 = vadd.s32 %v364, 127
      %v366 = vshll.u32 %v365, 23
      %v367 = vor.u32 4788187, %v366
      %v368 = vand.u32 2147483647, %v367
      %v370 = vcvt.s32.f32 %v363
      %v371 = vmul.f32 %v370, %v368
      %v372 = vxor.u32 %v371, 2147483648
      %v373 = vsel %vm290, %v372, %v371
      %v374 = vsub.s32 4, %v350
      %v375 = vsel %vm290, %v374, %v350
      %v376 = vsel %vm289, %v287, %v373
      %v377 = vsel %vm289, 0, %v375
      %v378 = vcosq.f32.pop %v376
      %v379 = vsinq.f32.pop %v376
      %vm380 = vweird.f32 %v287
      %v381 = vand.u32 %v377, 3
      %vm382 = vcmp.lt.s32.totalorder %v381, 2
      %vm383 = vcmp.eq.s32.totalorder %v381, 0
      %v384 = vxor.u32 %v379, 2147483648
      %v385 = vsel %vm383, %v378, %v384
      %vm386 = vcmp.eq.s32.totalorder %v381, 2
      %v387 = vxor.u32 %v378, 2147483648
      %v388 = vsel %vm386, %v387, %v379
      %v389 = vsel %vm382, %v385, %v388
      %v390 = vsel %vm380, nan, %v389
      %v391 = vmul.f32 %v286, %v390
      %v392 = vadd.f32 %v391, 0.0
      %v393 = vadd.f32 %v252, %v392
      %394 = vst [vmem:[#allocation10] sm:$0xff] %v393
    $region37: #{tpu_custom_call.1} parent=1 // pred_fallthru
      _
    // Predicated region
    $region38: #{tpu_custom_call.1} parent=1 // pred_check
      _
    $region39: #{tpu_custom_call.1} parent=1 // pred_check_branch
      %396 = sbr.rel (0) target = $region41
    $region40: #{tpu_custom_call.1} parent=1 // pred_region
      %s398 = ssub.s32 128, 128
      %399 = vsyncadd [#allocation5], %s398
      %s401 = sshll.u32 [#allocation9], 4
      %s402 = int_to_ptr.vmem [resolvable:$true] %s401
      %404 = dma.vmem_to_hbm [thread:$0]  %s402, 128, %s4, [#allocation5]
    $region41: #{tpu_custom_call.1} parent=1 // pred_fallthru
      _
    // Predicated region
    $region42: #{tpu_custom_call.1} parent=1 // pred_check
      _
    $region43: #{tpu_custom_call.1} parent=1 // pred_check_branch
      %406 = sbr.rel (0) target = $region45
    $region44: #{tpu_custom_call.1} parent=1 // pred_region
      %s408 = ssub.s32 128, 128
      %409 = vsyncadd [#allocation11], %s408
      %s411 = sshll.u32 [#allocation10], 4
      %s412 = int_to_ptr.vmem [resolvable:$true] %s411
      %414 = dma.vmem_to_hbm [thread:$0]  %s412, 128, %s5, [#allocation11]
    $region45: #{tpu_custom_call.1} parent=1 // pred_fallthru
      _
    // Predicated region
    $region46: #{tpu_custom_call.1} parent=1 // pred_check
      _
    $region47: #{tpu_custom_call.1} parent=1 // pred_check_branch
      %416 = sbr.rel (0) target = $region49
    $region48: #{tpu_custom_call.1} parent=1 // pred_region
      %417 = dma.done [#allocation5], 128
    $region49: #{tpu_custom_call.1} parent=1 // pred_fallthru
      _
    // Predicated region
    $region50: #{tpu_custom_call.1} parent=1 // pred_check
      _
    $region51: #{tpu_custom_call.1} parent=1 // pred_check_branch
      %419 = sbr.rel (0) target = $region53
    $region52: #{tpu_custom_call.1} parent=1 // pred_region
      %420 = dma.done [#allocation11], 128
    $region53: #{tpu_custom_call.1} parent=1 // pred_fallthru
      _
    %421 = vsyncpa [#allocation4], 1
    %422 = vsyncpa [#allocation7], 1
    %423 = vsyncpa [#allocation5], 1
    %424 = vsyncpa [#allocation11], 1

</llo_original>
